<compile_context>
chip_gen: v7x
topology: tpu7x:2x2x1
jax: 0.10.0
libtpu: 0.0.40
codegen_flags: <defaults>
</compile_context>

<pallas_src>
import functools
import math

import jax
import jax.numpy as jnp
from jax.experimental import pallas as pl
from jax.experimental.pallas import tpu as pltpu

_EPS = 1e-12            # F.normalize eps
_EPS_SQ = _EPS * _EPS
_NEG_BIG = -1e30        # score for out-of-range patch rows in a partial tile


def _round_up(x, m):
    return (x + m - 1) // m * m


def _vmem_params():
    """(tiling budget, vmem_limit_bytes) scaled to this chip's VMEM capacity."""
    cap = 64 * 1024 * 1024
    try:
        cap = int(pltpu.get_tpu_info().vmem_capacity_bytes)
    except Exception:
        pass
    if cap <= 64 * 1024 * 1024:
        # v7x-class: 64 MiB per TensorCore -> stay conservative.
        return int(0.38 * cap), int(0.60 * cap)
    # v5e / v6e: 128 MiB physical (default scoped limit is far lower -> raise it).
    return int(0.60 * cap), min(int(0.80 * cap), 110 * 1024 * 1024)


def _choose_tiles(B, N, D, in_itemsize, budget):
    """Pick (TB, TN): batch rows and patch rows per grid step."""

    def working_set(tb, tn):
        img = 2 * tb * tn * D * in_itemsize          # double-buffered img DMA block
        tmp = 4 * tb * tn * D * 4                    # f32 upcast + elementwise temporaries
        sml = 2 * tb * D * (in_itemsize + 4)         # txt + out blocks (double buffered)
        wgt = 2 * (D * D + D) * 4                    # W^T + bias (double buffered)
        scr = tb * (D + 2) * 4                       # m / l / acc scratch
        return img + tmp + sml + wgt + scr

    # Batch tile: large enough to feed the MXU / amortize per-step overhead, but
    # >=2 tiles when B allows so both v7x TensorCores get a share of the
    # "parallel" batch axis.  (Either a multiple of 8 or == B, per BlockSpec rules.)
    tb = B if B <= 256 else 256
    if B >= 16:
        tb = min(tb, _round_up((B + 1) // 2, 8))
    while tb > 8 and working_set(tb, min(8, N)) > budget:
        tb = max(8, _round_up(tb // 2, 8))

    # Patch tile: as big as the budget allows (fewer grid steps, bigger DMAs).
    if working_set(tb, N) <= budget:
        tn = N
    else:
        fixed = working_set(tb, 0)
        per_tn = tb * D * (2 * in_itemsize + 4 * 4)
        tn = (budget - fixed) // per_tn
        tn = int(max(8, min((tn // 8) * 8, _round_up(N, 8))))
        if tn >= N:
            tn = N
    return int(tb), int(tn)


def _pooling_kernel(img_ref, txt_ref, wt_ref, b_ref, out_ref,
                    m_sc, l_sc, acc_sc,
                    *, inv_tau, n_total, tn, mask_patches):
    # Per-step shapes:
    #   img_ref : (TB, TN, D)   txt_ref : (TB, D)
    #   wt_ref  : (D, D) (pre-transposed: y = x @ W^T + b)   b_ref : (1, D)
    #   out_ref : (TB, D)   scratch: m (TB,1), l (TB,1), acc (TB,D)  all f32
    n_idx = pl.program_id(1)

    @pl.when(n_idx == 0)
    def _init():
        m_sc[...] = jnp.full_like(m_sc, -jnp.inf)
        l_sc[...] = jnp.zeros_like(l_sc)
        acc_sc[...] = jnp.zeros_like(acc_sc)

    img = img_ref[...].astype(jnp.float32)                 # (TB, TN, D)
    txt = txt_ref[...].astype(jnp.float32)                 # (TB, D)

    if mask_patches:
        # Partial last patch tile: zero the stale rows so garbage (possibly
        # Inf/NaN) never reaches the accumulators, and mask their scores.
        patch = n_idx * tn + jax.lax.broadcasted_iota(jnp.int32, img.shape[:2], 1)
        valid = patch < n_total                             # (TB, TN)
        img = jnp.where(valid[:, :, None], img, 0.0)

    # Cosine similarity without materializing normalized embeddings.
    dot = jnp.sum(img * txt[:, None, :], axis=-1)           # (TB, TN)
    ssq = jnp.sum(img * img, axis=-1)                       # (TB, TN)
    txt_ssq = jnp.sum(txt * txt, axis=-1, keepdims=True)    # (TB, 1)
    inv_img = jax.lax.rsqrt(jnp.maximum(ssq, _EPS_SQ))      # EUP, no sqrt+divide
    inv_txt = jax.lax.rsqrt(jnp.maximum(txt_ssq, _EPS_SQ))  # EUP
    scores = dot * (inv_img * (inv_txt * inv_tau))          # (TB, TN) = sim / tau

    if mask_patches:
        scores = jnp.where(valid, scores, _NEG_BIG)

    # Online softmax over the patch axis (TrainableSoftSort weights) fused with
    # the weighted pooling of the *unnormalized* embeddings.
    m_prev = m_sc[...]
    m_new = jnp.maximum(m_prev, jnp.max(scores, axis=-1, keepdims=True))
    alpha = jnp.exp(m_prev - m_new)                          # (TB, 1)
    p = jnp.exp(scores - m_new)                              # (TB, TN)
    l_sc[...] = alpha * l_sc[...] + jnp.sum(p, axis=-1, keepdims=True)
    acc_sc[...] = alpha * acc_sc[...] + jnp.sum(img * p[:, :, None], axis=1)
    m_sc[...] = m_new

    @pl.when(n_idx == pl.num_programs(1) - 1)
    def _finalize():
        # Exact divide (approx reciprocal's error is too close to 1e-4 tol).
        fused = acc_sc[...] / l_sc[...]                      # (TB, D)
        out = jnp.dot(fused, wt_ref[...],
                      preferred_element_type=jnp.float32) + b_ref[...]
        out_ref[...] = out.astype(out_ref.dtype)


def text_guided_softsort_pooling(img_embeddings, text_embedding, w_proj, b_proj, tau):
    """Forward pass of TextGuidedSoftSortPooling with trainable_softsort weights.

    img_embeddings: (B, N, D), text_embedding: (B, D),
    w_proj: (D, D) PyTorch nn.Linear weight (out, in), b_proj: (D,), tau: scalar.
    """
    B, N, D = img_embeddings.shape
    assert text_embedding.shape == (B, D)

    budget, vmem_limit = _vmem_params()
    itemsize = jnp.dtype(img_embeddings.dtype).itemsize
    tb, tn = _choose_tiles(B, N, D, itemsize, budget)
    nb, nn = pl.cdiv(B, tb), pl.cdiv(N, tn)
    mask_patches = (N % tn) != 0

    # Only the tiny parameter tensors are rearranged on the host side; the big
    # img / text tensors go straight into the kernel (no padding copies).
    wt = jnp.asarray(w_proj, jnp.float32).T                  # (in, out) for x @ W^T
    bias = jnp.asarray(b_proj, jnp.float32).reshape(1, D)

    kernel = functools.partial(
        _pooling_kernel,
        inv_tau=float(1.0 / float(tau)),
        n_total=N, tn=tn, mask_patches=mask_patches)

    return pl.pallas_call(
        kernel,
        out_shape=jax.ShapeDtypeStruct((B, D), img_embeddings.dtype),
        grid=(nb, nn),
        in_specs=[
            pl.BlockSpec((tb, tn, D), lambda b, n: (b, n, 0)),   # img (streamed)
            pl.BlockSpec((tb, D), lambda b, n: (b, 0)),          # text (resident over n)
            pl.BlockSpec((D, D), lambda b, n: (0, 0)),           # W^T (resident)
            pl.BlockSpec((1, D), lambda b, n: (0, 0)),           # bias (resident)
        ],
        out_specs=pl.BlockSpec((tb, D), lambda b, n: (b, 0)),
        scratch_shapes=[
            pltpu.VMEM((tb, 1), jnp.float32),    # running max  m
            pltpu.VMEM((tb, 1), jnp.float32),    # running sum  l
            pltpu.VMEM((tb, D), jnp.float32),    # running weighted pooling acc
        ],
        compiler_params=pltpu.CompilerParams(
            dimension_semantics=("parallel", "arbitrary"),
            vmem_limit_bytes=vmem_limit),
    )(img_embeddings, text_embedding, wt, bias)


def _reference(img, txt, w_proj, b_proj, tau):
    """Pure-JAX reference mirroring the PyTorch forward (high precision)."""
    img_n = img / jnp.maximum(jnp.linalg.norm(img, axis=-1, keepdims=True), _EPS)
    txt_n = txt / jnp.maximum(jnp.linalg.norm(txt, axis=-1, keepdims=True), _EPS)
    sim = jnp.sum(img_n * txt_n[:, None, :], axis=-1)
    w = jax.nn.softmax(sim / tau, axis=-1)
    fused = jnp.sum(img * w[..., None], axis=1)
    return jnp.dot(fused, w_proj.T, precision=jax.lax.Precision.HIGHEST) + b_proj


if __name__ == "__main__":
    B, N, D = 2, 8, 32
    TAU = 0.1

    key = jax.random.PRNGKey(0)
    k_img, k_txt, k_w, k_b = jax.random.split(key, 4)
    img = jax.random.normal(k_img, (B, N, D), dtype=jnp.float32)
    txt = jax.random.normal(k_txt, (B, D), dtype=jnp.float32)
    # Deterministic stand-in for nn.Linear(hidden_dim, hidden_dim) parameters.
    bound = 1.0 / math.sqrt(D)
    w_proj = jax.random.uniform(k_w, (D, D), minval=-bound, maxval=bound,
                                dtype=jnp.float32)
    b_proj = jax.random.uniform(k_b, (D,), minval=-bound, maxval=bound,
                                dtype=jnp.float32)

    out = text_guided_softsort_pooling(img, txt, w_proj, b_proj, TAU)
    out = jax.block_until_ready(out)

    ref = _reference(img, txt, w_proj, b_proj, TAU)
    assert out.shape == (B, D)
    max_err = float(jnp.max(jnp.abs(out - ref)))
    assert jnp.allclose(out, ref, atol=2e-4, rtol=2e-4), f"max abs err {max_err}"
    print("KERNEL_OK")
</pallas_src>

<mosaic_0001>
module attributes {stable_mosaic.version = 11 : i64} {
  func.func @_pooling_kernel(%arg0: i32, %arg1: i32, %arg2: memref<2x8x32xf32, #tpu.memory_space<vmem>>, %arg3: memref<2x32xf32, #tpu.memory_space<vmem>>, %arg4: memref<32x32xf32, #tpu.memory_space<vmem>>, %arg5: memref<1x32xf32, #tpu.memory_space<vmem>>, %arg6: memref<2x32xf32, #tpu.memory_space<vmem>>, %arg7: memref<2x1xf32, #tpu.memory_space<vmem>>, %arg8: memref<2x1xf32, #tpu.memory_space<vmem>>, %arg9: memref<2x32xf32, #tpu.memory_space<vmem>>) attributes {dimension_semantics = [#tpu.dimension_semantics<parallel>, #tpu.dimension_semantics<arbitrary>], iteration_bounds = array<i64: 1, 1>, scalar_prefetch = 0 : i64, scratch_operands = 3 : i64, tpu.core_type = #tpu.core_type<tc>, window_params = [{transform_indices = @transform_0, window_bounds = array<i64: 2, 8, 32>}, {transform_indices = @transform_1, window_bounds = array<i64: 2, 32>}, {pipeline_mode = #tpu.pipeline_mode<synchronous>, transform_indices = @transform_2, window_bounds = array<i64: 32, 32>}, {pipeline_mode = #tpu.pipeline_mode<synchronous>, transform_indices = @transform_3, window_bounds = array<i64: 1, 32>}, {transform_indices = @transform_4, window_bounds = array<i64: 2, 32>}]} {
    %c0_i32 = arith.constant 0 : i32
    %0 = arith.cmpi eq, %arg1, %c0_i32 : i32
    %1 = arith.extui %0 : i1 to i32
    %c0_i32_0 = arith.constant 0 : i32
    %2 = arith.cmpi ne, %1, %c0_i32_0 : i32
    scf.if %2 {
      %cst_27 = arith.constant 0xFF800000 : f32
      %53 = vector.broadcast %cst_27 : f32 to vector<2x1xf32>
      %c0_28 = arith.constant 0 : index
      %c0_29 = arith.constant 0 : index
      %54 = vector.load %arg7[%c0_28, %c0_29] : memref<2x1xf32, #tpu.memory_space<vmem>>, vector<2x1xf32>
      tpu.vector_store %arg7[%c0_28, %c0_29], %53 {strides = array<i32>} : memref<2x1xf32, #tpu.memory_space<vmem>>, vector<2x1xf32>,
      %cst_30 = arith.constant 0.000000e+00 : f32
      %55 = vector.broadcast %cst_30 : f32 to vector<2x1xf32>
      %c0_31 = arith.constant 0 : index
      %c0_32 = arith.constant 0 : index
      %56 = vector.load %arg8[%c0_31, %c0_32] : memref<2x1xf32, #tpu.memory_space<vmem>>, vector<2x1xf32>
      tpu.vector_store %arg8[%c0_31, %c0_32], %55 {strides = array<i32>} : memref<2x1xf32, #tpu.memory_space<vmem>>, vector<2x1xf32>,
      %cst_33 = arith.constant 0.000000e+00 : f32
      %57 = vector.broadcast %cst_33 : f32 to vector<2x32xf32>
      %c0_34 = arith.constant 0 : index
      %c0_35 = arith.constant 0 : index
      %58 = vector.load %arg9[%c0_34, %c0_35] : memref<2x32xf32, #tpu.memory_space<vmem>>, vector<2x32xf32>
      tpu.vector_store %arg9[%c0_34, %c0_35], %57 {strides = array<i32>} : memref<2x32xf32, #tpu.memory_space<vmem>>, vector<2x32xf32>,
    } else {
    }
    %c0 = arith.constant 0 : index
    %c0_1 = arith.constant 0 : index
    %c0_2 = arith.constant 0 : index
    %3 = vector.load %arg2[%c0, %c0_1, %c0_2] : memref<2x8x32xf32, #tpu.memory_space<vmem>>, vector<2x8x32xf32>
    %c0_3 = arith.constant 0 : index
    %c0_4 = arith.constant 0 : index
    %4 = vector.load %arg3[%c0_3, %c0_4] : memref<2x32xf32, #tpu.memory_space<vmem>>, vector<2x32xf32>
    %5 = vector.shape_cast %4 : vector<2x32xf32> to vector<2x1x32xf32>
    %6 = vector.broadcast %5 : vector<2x1x32xf32> to vector<2x8x32xf32>
    %7 = arith.mulf %3, %6 : vector<2x8x32xf32>
    %cst = arith.constant dense<0.000000e+00> : vector<2x8xf32>
    %8 = vector.multi_reduction <add>, %7, %cst [2] : vector<2x8x32xf32> to vector<2x8xf32>
    %9 = arith.mulf %3, %3 : vector<2x8x32xf32>
    %cst_5 = arith.constant dense<0.000000e+00> : vector<2x8xf32>
    %10 = vector.multi_reduction <add>, %9, %cst_5 [2] : vector<2x8x32xf32> to vector<2x8xf32>
    %11 = arith.mulf %4, %4 : vector<2x32xf32>
    %cst_6 = arith.constant dense<0.000000e+00> : vector<2xf32>
    %12 = vector.multi_reduction <add>, %11, %cst_6 [1] : vector<2x32xf32> to vector<2xf32>
    %13 = vector.shape_cast %12 : vector<2xf32> to vector<2x1xf32>
    %cst_7 = arith.constant 1.000000e-24 : f32
    %14 = vector.broadcast %cst_7 : f32 to vector<2x8xf32>
    %15 = arith.maximumf %10, %14 : vector<2x8xf32>
    %16 = math.rsqrt %15 : vector<2x8xf32>
    %cst_8 = arith.constant 1.000000e-24 : f32
    %17 = vector.broadcast %cst_8 : f32 to vector<2x1xf32>
    %18 = arith.maximumf %13, %17 : vector<2x1xf32>
    %19 = math.rsqrt %18 : vector<2x1xf32>
    %cst_9 = arith.constant 1.000000e+01 : f32
    %20 = vector.broadcast %cst_9 : f32 to vector<2x1xf32>
    %21 = arith.mulf %19, %20 : vector<2x1xf32>
    %22 = vector.broadcast %21 : vector<2x1xf32> to vector<2x8xf32>
    %23 = arith.mulf %16, %22 : vector<2x8xf32>
    %24 = arith.mulf %8, %23 : vector<2x8xf32>
    %c0_10 = arith.constant 0 : index
    %c0_11 = arith.constant 0 : index
    %25 = vector.load %arg7[%c0_10, %c0_11] : memref<2x1xf32, #tpu.memory_space<vmem>>, vector<2x1xf32>
    %cst_12 = arith.constant dense<0xFF800000> : vector<2xf32>
    %26 = vector.multi_reduction <maximumf>, %24, %cst_12 [1] : vector<2x8xf32> to vector<2xf32>
    %27 = vector.shape_cast %26 : vector<2xf32> to vector<2x1xf32>
    %28 = arith.maximumf %25, %27 : vector<2x1xf32>
    %29 = arith.subf %25, %28 : vector<2x1xf32>
    %30 = math.exp %29 : vector<2x1xf32>
    %31 = vector.broadcast %28 : vector<2x1xf32> to vector<2x8xf32>
    %32 = arith.subf %24, %31 : vector<2x8xf32>
    %33 = math.exp %32 : vector<2x8xf32>
    %c0_13 = arith.constant 0 : index
    %c0_14 = arith.constant 0 : index
    %34 = vector.load %arg8[%c0_13, %c0_14] : memref<2x1xf32, #tpu.memory_space<vmem>>, vector<2x1xf32>
    %35 = arith.mulf %30, %34 : vector<2x1xf32>
    %cst_15 = arith.constant dense<0.000000e+00> : vector<2xf32>
    %36 = vector.multi_reduction <add>, %33, %cst_15 [1] : vector<2x8xf32> to vector<2xf32>
    %37 = vector.shape_cast %36 : vector<2xf32> to vector<2x1xf32>
    %38 = arith.addf %35, %37 : vector<2x1xf32>
    %c0_16 = arith.constant 0 : index
    %c0_17 = arith.constant 0 : index
    %39 = vector.load %arg8[%c0_16, %c0_17] : memref<2x1xf32, #tpu.memory_space<vmem>>, vector<2x1xf32>
    tpu.vector_store %arg8[%c0_16, %c0_17], %38 {strides = array<i32>} : memref<2x1xf32, #tpu.memory_space<vmem>>, vector<2x1xf32>,
    %c0_18 = arith.constant 0 : index
    %c0_19 = arith.constant 0 : index
    %40 = vector.load %arg9[%c0_18, %c0_19] : memref<2x32xf32, #tpu.memory_space<vmem>>, vector<2x32xf32>
    %41 = vector.broadcast %30 : vector<2x1xf32> to vector<2x32xf32>
    %42 = arith.mulf %41, %40 : vector<2x32xf32>
    %43 = vector.shape_cast %33 : vector<2x8xf32> to vector<2x8x1xf32>
    %44 = vector.broadcast %43 : vector<2x8x1xf32> to vector<2x8x32xf32>
    %45 = arith.mulf %3, %44 : vector<2x8x32xf32>
    %cst_20 = arith.constant dense<0.000000e+00> : vector<2x32xf32>
    %46 = vector.multi_reduction <add>, %45, %cst_20 [1] : vector<2x8x32xf32> to vector<2x32xf32>
    %47 = arith.addf %42, %46 : vector<2x32xf32>
    %c0_21 = arith.constant 0 : index
    %c0_22 = arith.constant 0 : index
    %48 = vector.load %arg9[%c0_21, %c0_22] : memref<2x32xf32, #tpu.memory_space<vmem>>, vector<2x32xf32>
    tpu.vector_store %arg9[%c0_21, %c0_22], %47 {strides = array<i32>} : memref<2x32xf32, #tpu.memory_space<vmem>>, vector<2x32xf32>,
    %c0_23 = arith.constant 0 : index
    %c0_24 = arith.constant 0 : index
    %49 = vector.load %arg7[%c0_23, %c0_24] : memref<2x1xf32, #tpu.memory_space<vmem>>, vector<2x1xf32>
    tpu.vector_store %arg7[%c0_23, %c0_24], %28 {strides = array<i32>} : memref<2x1xf32, #tpu.memory_space<vmem>>, vector<2x1xf32>,
    %c0_i32_25 = arith.constant 0 : i32
    %50 = arith.cmpi eq, %arg1, %c0_i32_25 : i32
    %51 = arith.extui %50 : i1 to i32
    %c0_i32_26 = arith.constant 0 : i32
    %52 = arith.cmpi ne, %51, %c0_i32_26 : i32
    scf.if %52 {
      %c0_27 = arith.constant 0 : index
      %c0_28 = arith.constant 0 : index
      %53 = vector.load %arg9[%c0_27, %c0_28] : memref<2x32xf32, #tpu.memory_space<vmem>>, vector<2x32xf32>
      %c0_29 = arith.constant 0 : index
      %c0_30 = arith.constant 0 : index
      %54 = vector.load %arg8[%c0_29, %c0_30] : memref<2x1xf32, #tpu.memory_space<vmem>>, vector<2x1xf32>
      %55 = vector.broadcast %54 : vector<2x1xf32> to vector<2x32xf32>
      %56 = arith.divf %53, %55 : vector<2x32xf32>
      %c0_31 = arith.constant 0 : index
      %c0_32 = arith.constant 0 : index
      %57 = vector.load %arg4[%c0_31, %c0_32] : memref<32x32xf32, #tpu.memory_space<vmem>>, vector<32x32xf32>
      %cst_33 = arith.constant dense<0.000000e+00> : vector<2x32xf32>
      %58 = tpu.matmul %56, %57, %cst_33 {dimension_numbers = #tpu.dot_dimension_numbers<[1], [0], [0], [1], [0, 0, 1, 1], [], []>} : vector<2x32xf32>, vector<32x32xf32>, vector<2x32xf32> -> vector<2x32xf32>
      %c0_34 = arith.constant 0 : index
      %c0_35 = arith.constant 0 : index
      %59 = vector.load %arg5[%c0_34, %c0_35] : memref<1x32xf32, #tpu.memory_space<vmem>>, vector<1x32xf32>
      %60 = vector.broadcast %59 : vector<1x32xf32> to vector<2x32xf32>
      %61 = arith.addf %58, %60 : vector<2x32xf32>
      %c0_36 = arith.constant 0 : index
      %c0_37 = arith.constant 0 : index
      %62 = vector.load %arg6[%c0_36, %c0_37] : memref<2x32xf32, #tpu.memory_space<vmem>>, vector<2x32xf32>
      tpu.vector_store %arg6[%c0_36, %c0_37], %61 {strides = array<i32>} : memref<2x32xf32, #tpu.memory_space<vmem>>, vector<2x32xf32>,
    } else {
    }
    return
  }
  func.func @transform_0(%arg0: i32, %arg1: i32) -> (i32, i32, i32) {
    %c0_i32 = arith.constant 0 : i32
    %c0_i32_0 = arith.constant 0 : i32
    return %arg0, %arg1, %c0_i32 : i32, i32, i32
  }
  func.func @transform_1(%arg0: i32, %arg1: i32) -> (i32, i32) {
    %c0_i32 = arith.constant 0 : i32
    %c0_i32_0 = arith.constant 0 : i32
    return %arg0, %c0_i32 : i32, i32
  }
  func.func @transform_2(%arg0: i32, %arg1: i32) -> (i32, i32) {
    %c0_i32 = arith.constant 0 : i32
    %c0_i32_0 = arith.constant 0 : i32
    %c0_i32_1 = arith.constant 0 : i32
    return %c0_i32, %c0_i32_0 : i32, i32
  }
  func.func @transform_3(%arg0: i32, %arg1: i32) -> (i32, i32) {
    %c0_i32 = arith.constant 0 : i32
    %c0_i32_0 = arith.constant 0 : i32
    %c0_i32_1 = arith.constant 0 : i32
    return %c0_i32, %c0_i32_0 : i32, i32
  }
  func.func @transform_4(%arg0: i32, %arg1: i32) -> (i32, i32) {
    %c0_i32 = arith.constant 0 : i32
    %c0_i32_0 = arith.constant 0 : i32
    return %arg0, %c0_i32 : i32, i32
  }
}

</mosaic_0001>

<llo_original>
// kernel: tpu_custom_call.1
$region0: #{tpu_custom_call.1}
  #allocation0 [shape = 'u32[]', space=smem, size = 0x4, offset = 0x4, fixed_abs, tag = 'smem constant byte address 0x4 - core index']
  #allocation1 [shape = 'u32[144,128]{1,0:T(1,128)}', space=vmem, size = 0x12000, scoped, tag = 'internal scratch']
  #allocation2 [shape = 'f32[2,1]{1,0:T(2,128)}', space=vmem, size = 0x400, scoped, tag = 'scratch operand']
  #allocation3 [shape = 'f32[2,1]{1,0:T(2,128)}', space=vmem, size = 0x400, scoped, tag = 'scratch operand']
  #allocation4 [shape = 'f32[2,32]{1,0:T(2,128)}', space=vmem, size = 0x400, scoped, tag = 'scratch operand']
  %s0 = inlined_call_operand.hbm [shape: f32[2,8,32], index: 0, kind: input, shape index: {}]
  %s1 = inlined_call_operand.vmem [shape: f32[2,32], index: 1, kind: input, shape index: {}]
  %s2 = inlined_call_operand.hbm [shape: f32[32,32], index: 2, kind: input, shape index: {}]
  %s3 = inlined_call_operand.vmem [shape: f32[1,32], index: 3, kind: input, shape index: {}]
  %s4 = inlined_call_operand.hbm [shape: f32[2,32], index: 4, kind: output, shape index: {}]
  %s5 = sld [smem:[#allocation0]]
  $region42: #{tpu_custom_call.1} parent=0
    _
  %s7 = ssub.s32 1, %s5
  %s8 = scalar_select 0, %s7, %s5
  $region1: #{tpu_custom_call.1} parent=0
    #allocation5 [shape = 'u8[8192]{0}', space=vmem, size = 0x2000, scoped, tag = 'input window, operand 0, single buffered']
    #allocation6 [shape = 's32[1]{0}', space=sflag, size = 0x4, scoped, tag = 'scoped memory for tpu_custom_call.1']
    #allocation7 [shape = 's32[1]{0}', space=sflag, size = 0x4, scoped, tag = 'scoped memory for tpu_custom_call.1']
    #allocation8 [shape = 'u8[16384]{0}', space=vmem, size = 0x4000, scoped, tag = 'input window, operand 2, single buffered']
    #allocation9 [shape = 's32[1]{0}', space=sflag, size = 0x4, scoped, tag = 'scoped memory for tpu_custom_call.1']
    #allocation10 [shape = 'u8[1024]{0}', space=vmem, size = 0x400, scoped, tag = 'output window, operand 0, single buffered']
    %9 = vsyncpa [#allocation6], 0
    %10 = vsyncpa [#allocation9], 0
    %11 = vsyncpa [#allocation7], 0
    // Predicated region
    $region2: #{tpu_custom_call.1} parent=1 // pred_check
      _
    $region3: #{tpu_custom_call.1} parent=1 // pred_check_branch
      %13 = sbr.rel (0) target = $region5
    $region4: #{tpu_custom_call.1} parent=1 // pred_region
      %s15 = ssub.s32 256, 256
      %16 = vsyncadd [#allocation6], %s15
      %s17 = sshll.u32 [#allocation5], 4
      %s18 = int_to_ptr.vmem [resolvable:$true] %s17
      %23 = dma.hbm_to_vmem [thread:$0]  %s0, 256, %s18, [#allocation6], 128, 128, 8
    $region5: #{tpu_custom_call.1} parent=1 // pred_fallthru
      _
    // Predicated region
    $region6: #{tpu_custom_call.1} parent=1 // pred_check
      _
    $region7: #{tpu_custom_call.1} parent=1 // pred_check_branch
      %25 = sbr.rel (0) target = $region9
    $region8: #{tpu_custom_call.1} parent=1 // pred_region
      _
    $region9: #{tpu_custom_call.1} parent=1 // pred_fallthru
      _
    // Predicated region
    $region10: #{tpu_custom_call.1} parent=1 // pred_check
      _
    $region11: #{tpu_custom_call.1} parent=1 // pred_check_branch
      %27 = sbr.rel (0) target = $region13
    $region12: #{tpu_custom_call.1} parent=1 // pred_region
      %s29 = ssub.s32 512, 512
      %30 = vsyncadd [#allocation9], %s29
      %s31 = sshll.u32 [#allocation8], 4
      %s32 = int_to_ptr.vmem [resolvable:$true] %s31
      %37 = dma.hbm_to_vmem [thread:$0]  %s2, 512, %s32, [#allocation9], 128, 128, 8
    $region13: #{tpu_custom_call.1} parent=1 // pred_fallthru
      _
    // Predicated region
    $region14: #{tpu_custom_call.1} parent=1 // pred_check
      _
    $region15: #{tpu_custom_call.1} parent=1 // pred_check_branch
      %39 = sbr.rel (0) target = $region17
    $region16: #{tpu_custom_call.1} parent=1 // pred_region
      _
    $region17: #{tpu_custom_call.1} parent=1 // pred_fallthru
      _
    // Predicated region
    $region18: #{tpu_custom_call.1} parent=1 // pred_check
      _
    $region19: #{tpu_custom_call.1} parent=1 // pred_check_branch
      %41 = sbr.rel (0) target = $region21
    $region20: #{tpu_custom_call.1} parent=1 // pred_region
      %42 = dma.done [#allocation6], 256
    $region21: #{tpu_custom_call.1} parent=1 // pred_fallthru
      _
    // Predicated region
    $region22: #{tpu_custom_call.1} parent=1 // pred_check
      _
    $region23: #{tpu_custom_call.1} parent=1 // pred_check_branch
      %44 = sbr.rel (0) target = $region25
    $region24: #{tpu_custom_call.1} parent=1 // pred_region
      %45 = dma.done [#allocation9], 512
    $region25: #{tpu_custom_call.1} parent=1 // pred_fallthru
      _
    %p46 = scmp.eq.s32.totalorder 0, 0
    // Predicated region
    $region26: #{tpu_custom_call.1} parent=1 // pred_check
      %p47 = pneg %p46
    $region27: #{tpu_custom_call.1} parent=1 // pred_check_branch
      %49 = sbr.rel (%p47) target = $region29
    $region28: #{tpu_custom_call.1} parent=1 // pred_region
      %vm50 = vcmask 1024
      %51 = vst.msk [vmem:[#allocation2] sm:$0x3] %vm50, -inf
      %52 = vst.msk [vmem:[#allocation3] sm:$0x3] %vm50, 0.0
      %vm53 = vcmask 254976
      %54 = vst.msk [vmem:[#allocation4] sm:$0x3] %vm53, 0.0
    $region29: #{tpu_custom_call.1} parent=1 // pred_fallthru
      _
    %v55 = vld [vmem:[#allocation5] sm:$0xff]
    %v56 = vld [vmem:[#allocation5 + $0x8] sm:$0xff]
    %v57 = vld [vmem:[%s1] sm:$0x3]
    %v60 = vunpack.c.l.s4 1966171168
    %v61 = vunpack.c.0.s8 %v60
    %v62 = vlaneseq
    %v63 = vshrl.u32 %v62, 7
    %v64 = vsub.s32 %v61, %v63
    %v65 = vrot.slane %v57, %v64
    %v66 = vcombine.high %v65, %v65
    %v68 = vunpack.c.l.s4 1966171168
    %v69 = vunpack.c.0.s8 %v68
    %v70 = vlaneseq
    %v71 = vshrl.u32 %v70, 7
    %v72 = vsub.s32 %v69, %v71
    %v73 = vrot.slane %v65, %v72
    %v75 = vunpack.c.l.s4 1966171168
    %v76 = vunpack.c.0.s8 %v75
    %v77 = vlaneseq
    %v78 = vshrl.u32 %v77, 7
    %v79 = vsub.s32 %v76, %v78
    %v80 = vrot.slane %v66, %v79
    %v81 = vlaneseq
    %v82 = vshrl.u32 %v81, 7
    %v83 = vsub.s32 0, %v82
    %v84 = vrot.slane %v73, %v83
    %v85 = vlaneseq
    %v86 = vshrl.u32 %v85, 7
    %v87 = vsub.s32 0, %v86
    %v88 = vrot.slane %v80, %v87
    %v91 = vmul.f32 %v55, %v84
    %v92 = vmul.f32 %v56, %v88
    %vm93 = vcmask 261120
    %v94 = vsel %vm93, %v91, 0.0
    %95 = vadd.xlane.f32.xlu0 %v94
    %v96 = vpop.xlane.xlu0 %95
    %v97 = vsel %vm93, %v92, 0.0
    %98 = vadd.xlane.f32.xlu0 %v97
    %v99 = vpop.xlane.xlu0 %98
    %v100 = vmul.f32 %v55, %v55
    %v101 = vmul.f32 %v56, %v56
    %v102 = vsel %vm93, %v100, 0.0
    %103 = vadd.xlane.f32.xlu0 %v102
    %v104 = vpop.xlane.xlu0 %103
    %v105 = vsel %vm93, %v101, 0.0
    %106 = vadd.xlane.f32.xlu0 %v105
    %v107 = vpop.xlane.xlu0 %106
    %v108 = vmul.f32 %v57, %v57
    %vm109 = vcmask 254976
    %v110 = vsel %vm109, %v108, 0.0
    %111 = vadd.xlane.f32.xlu0 %v110
    %v112 = vpop.xlane.xlu0 %111
    %v113 = vmax.f32 %v104, 1e-24
    %v114 = vmax.f32 %v107, 1e-24
    %v115 = vrsqrt.pop %v113
    %v116 = vrsqrt.pop %v114
    %v117 = vmax.f32 %v112, 1e-24
    %v118 = vrsqrt.pop %v117
    %v119 = vmul.f32 %v118, 10.0
    %v121 = vlaneseq
    %v122 = vshrl.u32 %v121, 7
    %v123 = vsub.s32 0, %v122
    %v124 = vrot.slane %v119, %v123
    %v125 = vlaneseq
    %v126 = vshrl.u32 %v125, 7
    %v127 = vsub.s32 1, %v126
    %v128 = vrot.slane %v119, %v127
    %v131 = vmul.f32 %v115, %v124
    %v132 = vmul.f32 %v116, %v128
    %v133 = vmul.f32 %v96, %v131
    %v134 = vmul.f32 %v99, %v132
    %v135 = vld [vmem:[#allocation2] sm:$0x3]
    %138 = vset.pattern.permute.xlu0 0
    %139 = vperm.xlu0 %138, %v133
    %v140 = vpop.permute.xlu0 %139
    %141 = vset.pattern.permute.xlu0 0
    %142 = vperm.xlu0 %141, %v134
    %v143 = vpop.permute.xlu0 %142
    %v144 = vlaneseq
    %v145 = vand.u32 %v144, 127
    %v146 = vlaneseq
    %v147 = vshrl.u32 %v146, 7
    %v148 = vsub.s32 %v145, %v147
    %v149 = vrot.slane %v140, %v148
    %v150 = vlaneseq
    %v151 = vshrl.u32 %v150, 7
    %v152 = vsub.s32 %v145, %v151
    %v153 = vrot.slane %v143, %v152
    %vm154 = vcmask 1041409
    %v155 = vsel %vm154, %v153, %v149
    %vm157 = vcmask 58368
    %v158 = vsel %vm157, %v155, -inf
    %159 = vmax.xlane.f32.xlu0 %v158
    %v160 = vpop.xlane.xlu0 %159
    %v161 = vmax.f32 %v135, %v160
    %v162 = vsub.f32 %v135, %v161
    %v163 = vmul.f32 %v162, 1.442695
    %v164 = vpow.pop %v163
    %166 = vset.pattern.permute.xlu0 0
    %167 = vperm.xlu0 %166, %v161
    %v168 = vpop.permute.xlu0 %167
    %v169 = vlaneseq
    %v170 = vshrl.u32 %v169, 7
    %v171 = vsub.s32 0, %v170
    %v172 = vrot.slane %v168, %v171
    %v173 = vlaneseq
    %v174 = vshrl.u32 %v173, 7
    %v175 = vsub.s32 1, %v174
    %v176 = vrot.slane %v168, %v175
    %v179 = vsub.f32 %v133, %v172
    %v180 = vsub.f32 %v134, %v176
    %v181 = vmul.f32 %v179, 1.442695
    %v182 = vpow.pop %v181
    %v183 = vmul.f32 %v180, 1.442695
    %v184 = vpow.pop %v183
    %v185 = vld [vmem:[#allocation3] sm:$0x3]
    %v186 = vmul.f32 %v164, %v185
    %189 = vset.pattern.permute.xlu0 0
    %190 = vperm.xlu0 %189, %v182
    %v191 = vpop.permute.xlu0 %190
    %192 = vset.pattern.permute.xlu0 0
    %193 = vperm.xlu0 %192, %v184
    %v194 = vpop.permute.xlu0 %193
    %v195 = vlaneseq
    %v196 = vshrl.u32 %v195, 7
    %v197 = vsub.s32 %v145, %v196
    %v198 = vrot.slane %v191, %v197
    %v199 = vlaneseq
    %v200 = vshrl.u32 %v199, 7
    %v201 = vsub.s32 %v145, %v200
    %v202 = vrot.slane %v194, %v201
    %v203 = vsel %vm154, %v202, %v198
    %v205 = vsel %vm157, %v203, 0.0
    %206 = vadd.xlane.f32.xlu0 %v205
    %v207 = vpop.xlane.xlu0 %206
    %v208 = vadd.f32 %v186, %v207
    %vm209 = vcmask 1024
    %210 = vst.msk [vmem:[#allocation3] sm:$0x3] %vm209, %v208
    %v211 = vld [vmem:[#allocation4] sm:$0x3]
    %213 = vset.pattern.permute.xlu0 0
    %214 = vperm.xlu0 %213, %v164
    %v215 = vpop.permute.xlu0 %214
    %v217 = vmul.f32 %v215, %v211
    %v220 = vmul.f32 %v55, %v191
    %v221 = vmul.f32 %v56, %v194
    %v222 = vsel %vm93, %v220, 0.0
    %v223 = vrot.slane %v222, 4
    %v224 = vadd.f32 %v222, %v223
    %v225 = vrot.slane %v224, 2
    %v226 = vadd.f32 %v224, %v225
    %v227 = vrot.slane %v226, 1
    %v228 = vadd.f32 %v226, %v227
    %v229 = vsel %vm93, %v221, 0.0
    %v230 = vrot.slane %v229, 4
    %v231 = vadd.f32 %v229, %v230
    %v232 = vrot.slane %v231, 2
    %v233 = vadd.f32 %v231, %v232
    %v234 = vrot.slane %v233, 1
    %v235 = vadd.f32 %v233, %v234
    %v238 = vsel %vm154, %v235, %v228
    %v240 = vadd.f32 %v217, %v238
    %241 = vst.msk [vmem:[#allocation4] sm:$0x3] %vm109, %v240
    %242 = vst.msk [vmem:[#allocation2] sm:$0x3] %vm209, %v161
    // Predicated region
    $region30: #{tpu_custom_call.1} parent=1 // pred_check
      %p243 = pneg %p46
    $region31: #{tpu_custom_call.1} parent=1 // pred_check_branch
      %245 = sbr.rel (%p243) target = $region33
    $region32: #{tpu_custom_call.1} parent=1 // pred_region
      %v246 = vld [vmem:[#allocation4] sm:$0x3]
      %v247 = vld [vmem:[#allocation3] sm:$0x3]
      %249 = vset.pattern.permute.xlu0 0
      %250 = vperm.xlu0 %249, %v247
      %v251 = vpop.permute.xlu0 %250
      %v253 = vrcp.pop %v251
      %v254 = vmul.f32 %v246, %v253
      %v255 = vld [vmem:[#allocation8] sm:$0xff]
      %v256 = vld [vmem:[#allocation8 + $0x8] sm:$0xff]
      %v257 = vld [vmem:[#allocation8 + $0x10] sm:$0xff]
      %v258 = vld [vmem:[#allocation8 + $0x18] sm:$0xff]
      %v259 = vld [vmem:[%s3] sm:$0x1]
      %v261 = vlaneseq
      %v262 = vshrl.u32 %v261, 7
      %v263 = vsub.s32 0, %v262
      %v264 = vrot.slane %v259, %v263
      %v267 = vsel %vm93, %v254, 0
      %269 = vmatprep.subr.mxu0 0.0
      %270 = vmatpush1.msra.mxu0 %v255
      %271 = vmatprep.subr.mxu0 0.0
      %272 = vmatpush1.msra.mxu0 %v256
      %273 = vmatprep.subr.mxu0 0.0
      %274 = vmatpush1.msra.mxu0 %v257
      %275 = vmatprep.subr.mxu0 0.0
      %276 = vmatpush1.msra.mxu0 %v258
      %277 = vmatprep.subr.mxu0 0.0
      %278 = vmatpush1.msra.mxu0 0.0
      %279 = vmatprep.subr.mxu0 0.0
      %280 = vmatpush1.msra.mxu0 0.0
      %281 = vmatprep.subr.mxu0 0.0
      %282 = vmatpush1.msra.mxu0 0.0
      %283 = vmatprep.subr.mxu0 0.0
      %284 = vmatpush1.msra.mxu0 0.0
      %285 = vmatprep.subr.mxu0 0.0
      %286 = vmatpush1.msra.mxu0 0.0
      %287 = vmatprep.subr.mxu0 0.0
      %288 = vmatpush1.msra.mxu0 0.0
      %289 = vmatprep.subr.mxu0 0.0
      %290 = vmatpush1.msra.mxu0 0.0
      %291 = vmatprep.subr.mxu0 0.0
      %292 = vmatpush1.msra.mxu0 0.0
      %293 = vmatprep.subr.mxu0 0.0
      %294 = vmatpush1.msra.mxu0 0.0
      %295 = vmatprep.subr.mxu0 0.0
      %296 = vmatpush1.msra.mxu0 0.0
      %297 = vmatprep.subr.mxu0 0.0
      %298 = vmatpush1.msra.mxu0 0.0
      %299 = vmatprep.subr.mxu0 0.0
      %300 = vmatpush1.msra.mxu0 0.0
      %301 = vmatprep.subr.mxu0 0.0
      %302 = vmatpush1.msra.mxu0 0.0
      %303 = vmatprep.subr.mxu0 0.0
      %304 = vmatpush1.msra.mxu0 0.0
      %305 = vmatprep.subr.mxu0 0.0
      %306 = vmatpush1.msra.mxu0 0.0
      %307 = vmatprep.subr.mxu0 0.0
      %308 = vmatpush1.msra.mxu0 0.0
      %309 = vmatprep.subr.mxu0 0.0
      %310 = vmatpush1.msra.mxu0 0.0
      %311 = vmatprep.subr.mxu0 0.0
      %312 = vmatpush1.msra.mxu0 0.0
      %313 = vmatprep.subr.mxu0 0.0
      %314 = vmatpush1.msra.mxu0 0.0
      %315 = vmatprep.subr.mxu0 0.0
      %316 = vmatpush1.msra.mxu0 0.0
      %317 = vmatprep.subr.mxu0 0.0
      %318 = vmatpush1.msra.mxu0 0.0
      %319 = vmatprep.subr.mxu0 0.0
      %320 = vmatpush1.msra.mxu0 0.0
      %321 = vmatprep.subr.mxu0 0.0
      %322 = vmatpush1.msra.mxu0 0.0
      %323 = vmatprep.subr.mxu0 0.0
      %324 = vmatpush1.msra.mxu0 0.0
      %325 = vmatprep.subr.mxu0 0.0
      %326 = vmatpush1.msra.mxu0 0.0
      %327 = vmatprep.subr.mxu0 0.0
      %328 = vmatpush1.msra.mxu0 0.0
      %329 = vmatprep.subr.mxu0 0.0
      %330 = vmatpush1.msra.mxu0 0.0
      %331 = vmatprep.subr.mxu0 0.0
      %332 = vmatpush1.msra.mxu0 0.0
      %333 = vmatprep.mubr.f32.mxu0 0.0
      %334 = vmatmul.mubr.f32.gmra.mrb[0].mxu0 %v267
      %v335 = vpop.f32.mrb[0].mxu0
      %v336 = vadd.f32 %v264, %v335
      %v337 = vpop.f32.mrb[0].mxu0
      %338 = vdwg.mxu0
      %339 = vst.msk [vmem:[#allocation10] sm:$0x3] %vm109, %v336
    $region33: #{tpu_custom_call.1} parent=1 // pred_fallthru
      _
    // Predicated region
    $region34: #{tpu_custom_call.1} parent=1 // pred_check
      _
    $region35: #{tpu_custom_call.1} parent=1 // pred_check_branch
      %341 = sbr.rel (0) target = $region37
    $region36: #{tpu_custom_call.1} parent=1 // pred_region
      %s343 = ssub.s32 32, 32
      %344 = vsyncadd [#allocation7], %s343
      %s346 = sshll.u32 [#allocation10], 4
      %s347 = int_to_ptr.vmem [resolvable:$true] %s346
      %349 = dma.vmem_to_hbm [thread:$0]  %s347, 32, %s4, [#allocation7]
    $region37: #{tpu_custom_call.1} parent=1 // pred_fallthru
      _
    // Predicated region
    $region38: #{tpu_custom_call.1} parent=1 // pred_check
      _
    $region39: #{tpu_custom_call.1} parent=1 // pred_check_branch
      %351 = sbr.rel (0) target = $region41
    $region40: #{tpu_custom_call.1} parent=1 // pred_region
      %352 = dma.done [#allocation7], 32
    $region41: #{tpu_custom_call.1} parent=1 // pred_fallthru
      _
    %353 = vsyncpa [#allocation6], 1
    %354 = vsyncpa [#allocation9], 1
    %355 = vsyncpa [#allocation7], 1

</llo_original>
